<compile_context>
chip_gen: v7x
topology: tpu7x:2x2x1
jax: 0.10.0
libtpu: 0.0.40
codegen_flags: <defaults>
</compile_context>

<pallas_src>
import jax
import jax.numpy as jnp
from jax.experimental import pallas as pl
from jax.experimental.pallas import tpu as pltpu  # noqa: F401  (TPU backend import)


def _fused_kernel(w_ref, b_ref, x_ref, o_ref):
    # w_ref: (96, 64) fused weight, b_ref: (96, 1) fused bias (column broadcast)
    # x_ref: (64, T) channel-major input, o_ref: (96, T) channel-major output
    v2 = jnp.dot(w_ref[...], x_ref[...],
                 preferred_element_type=jnp.float32) + b_ref[...]

    # elementwise chain (tanh-GELU flavored, without the 0.5 factor — matches spec)
    v7 = v2 + (v2 * v2 * v2) * 0.044715
    v9 = jnp.tanh(v7 * 0.7978845608028654)
    o_ref[...] = (v2 * (v9 + 1.0)).astype(o_ref.dtype)


def model_forward(x2, x1, w1, b1, w2, b2):
    """x2: (N, 64, L) NCL float32.  x1 is unused (matches the PyTorch forward)."""
    del x1  # unused in the reference forward
    N, C_in, L = x2.shape
    C_out = w2.shape[0]   # 96

    # Fuse the two k=1 convs (no nonlinearity in between): one 64->96 linear map.
    w_f = jnp.dot(w2, w1)                               # (96, 64)
    b_f = (jnp.dot(w2, b1) + b2).reshape(C_out, 1)      # (96, 1)

    # Channel-major (C, T) layout. For N == 1 this is a free reshape (no transpose).
    T = N * L
    if N == 1:
        x_ct = x2.reshape(C_in, L)
    else:
        x_ct = jnp.transpose(x2, (1, 0, 2)).reshape(C_in, T)

    bytes_accessed = 4 * (C_in * T + C_out * C_in + C_out + C_out * T)
    cost = pl.CostEstimate(
        flops=2 * C_out * C_in * T + 8 * C_out * T,
        transcendentals=C_out * T,
        bytes_accessed=bytes_accessed,
    )

    # No grid, no tiling: whole arrays (<0.5 MiB total) live in VMEM as single blocks.
    out_ct = pl.pallas_call(
        _fused_kernel,
        out_shape=jax.ShapeDtypeStruct((C_out, T), jnp.float32),
        cost_estimate=cost,
    )(w_f, b_f, x_ct)

    # (C_out, T) -> NCL output; free reshape for N == 1.
    if N == 1:
        return out_ct.reshape(1, C_out, L)
    return jnp.transpose(out_ct.reshape(C_out, N, L), (1, 0, 2))


def _reference(x2, w1, b1, w2, b2):
    # Pure-JAX reference of the original (unfused) math for a sanity check.
    v1 = jnp.einsum("oc,ncl->nol", w1, x2) + b1[None, :, None]
    v2 = jnp.einsum("oc,ncl->nol", w2, v1) + b2[None, :, None]
    v7 = v2 + (v2 * v2 * v2) * 0.044715
    v9 = jnp.tanh(v7 * 0.7978845608028654)
    return v2 * (v9 + 1.0)


if __name__ == "__main__":
    key = jax.random.PRNGKey(0)
    k_x2, k_x1, k_w1, k_b1, k_w2, k_b2 = jax.random.split(key, 6)

    # Shapes implied by the module: x2 = (1, 64, 256); conv: 64->160, conv1: 160->96.
    N, C_in, L = 1, 64, 256
    C_mid, C_out = 160, 96

    x2 = jax.random.normal(k_x2, (N, C_in, L), dtype=jnp.float32)
    x1 = jax.random.normal(k_x1, (N, C_in, L), dtype=jnp.float32)  # unused by forward

    # Deterministic parameter init (roughly PyTorch's uniform(-1/sqrt(fan_in), ...)).
    w1 = jax.random.uniform(k_w1, (C_mid, C_in), jnp.float32,
                            minval=-1.0, maxval=1.0) / jnp.sqrt(C_in)
    b1 = jax.random.uniform(k_b1, (C_mid,), jnp.float32,
                            minval=-1.0, maxval=1.0) / jnp.sqrt(C_in)
    w2 = jax.random.uniform(k_w2, (C_out, C_mid), jnp.float32,
                            minval=-1.0, maxval=1.0) / jnp.sqrt(C_mid)
    b2 = jax.random.uniform(k_b2, (C_out,), jnp.float32,
                            minval=-1.0, maxval=1.0) / jnp.sqrt(C_mid)

    out = jax.block_until_ready(model_forward(x2, x1, w1, b1, w2, b2))
    ref = _reference(x2, w1, b1, w2, b2)

    assert out.shape == (N, C_out, L), out.shape
    # Slightly relaxed tolerance: the weight fusion (W2 @ W1) reorders f32 rounding.
    assert jnp.allclose(out, ref, atol=2e-4, rtol=2e-4), "mismatch vs reference"
    print("KERNEL_OK")
</pallas_src>

<mosaic_0001>
module attributes {stable_mosaic.version = 11 : i64} {
  func.func @_fused_kernel(%arg0: memref<96x64xf32, #tpu.memory_space<vmem>>, %arg1: memref<96x1xf32, #tpu.memory_space<vmem>>, %arg2: memref<64x256xf32, #tpu.memory_space<vmem>>, %arg3: memref<96x256xf32, #tpu.memory_space<vmem>>) attributes {dimension_semantics = [], scalar_prefetch = 0 : i64, scratch_operands = 0 : i64, tpu.core_type = #tpu.core_type<tc>} {
    %c0 = arith.constant 0 : index
    %c0_0 = arith.constant 0 : index
    %0 = vector.load %arg0[%c0, %c0_0] : memref<96x64xf32, #tpu.memory_space<vmem>>, vector<96x64xf32>
    %c0_1 = arith.constant 0 : index
    %c0_2 = arith.constant 0 : index
    %1 = vector.load %arg2[%c0_1, %c0_2] : memref<64x256xf32, #tpu.memory_space<vmem>>, vector<64x256xf32>
    %cst = arith.constant dense<0.000000e+00> : vector<96x256xf32>
    %2 = tpu.matmul %0, %1, %cst {dimension_numbers = #tpu.dot_dimension_numbers<[1], [0], [0], [1], [0, 0, 1, 1], [], []>} : vector<96x64xf32>, vector<64x256xf32>, vector<96x256xf32> -> vector<96x256xf32>
    %c0_3 = arith.constant 0 : index
    %c0_4 = arith.constant 0 : index
    %3 = vector.load %arg1[%c0_3, %c0_4] : memref<96x1xf32, #tpu.memory_space<vmem>>, vector<96x1xf32>
    %4 = vector.broadcast %3 : vector<96x1xf32> to vector<96x256xf32>
    %5 = arith.addf %2, %4 : vector<96x256xf32>
    %6 = arith.mulf %5, %5 : vector<96x256xf32>
    %7 = arith.mulf %6, %5 : vector<96x256xf32>
    %cst_5 = arith.constant 4.471500e-02 : f32
    %8 = vector.broadcast %cst_5 : f32 to vector<96x256xf32>
    %9 = arith.mulf %7, %8 : vector<96x256xf32>
    %10 = arith.addf %5, %9 : vector<96x256xf32>
    %cst_6 = arith.constant 0.797884583 : f32
    %11 = vector.broadcast %cst_6 : f32 to vector<96x256xf32>
    %12 = arith.mulf %10, %11 : vector<96x256xf32>
    %13 = math.tanh %12 : vector<96x256xf32>
    %cst_7 = arith.constant 1.000000e+00 : f32
    %14 = vector.broadcast %cst_7 : f32 to vector<96x256xf32>
    %15 = arith.addf %13, %14 : vector<96x256xf32>
    %16 = arith.mulf %5, %15 : vector<96x256xf32>
    %c0_8 = arith.constant 0 : index
    %c0_9 = arith.constant 0 : index
    %17 = vector.load %arg3[%c0_8, %c0_9] : memref<96x256xf32, #tpu.memory_space<vmem>>, vector<96x256xf32>
    tpu.vector_store %arg3[%c0_8, %c0_9], %16 {strides = array<i32>} : memref<96x256xf32, #tpu.memory_space<vmem>>, vector<96x256xf32>,
    return
  }
}

</mosaic_0001>

<llo_original>
// kernel: tpu_custom_call.1
$region0: #{tpu_custom_call.1}
  #allocation0 [shape = 'u32[]', space=smem, size = 0x4, offset = 0x4, fixed_abs, tag = 'smem constant byte address 0x4 - core index']
  #allocation1 [shape = 'u32[144,128]{1,0:T(1,128)}', space=vmem, size = 0x12000, scoped, tag = 'internal scratch']
  %s0 = inlined_call_operand.vmem [shape: f32[96,64], index: 0, kind: input, shape index: {}]
  %s1 = inlined_call_operand.vmem [shape: f32[96,1], index: 1, kind: input, shape index: {}]
  %s2 = inlined_call_operand.vmem [shape: f32[64,256], index: 2, kind: input, shape index: {}]
  %s3 = inlined_call_operand.hbm [shape: f32[96,256], index: 3, kind: output, shape index: {}]
  %s4 = sld [smem:[#allocation0]]
  $region22: #{tpu_custom_call.1} parent=0
    _
  %s6 = ssub.s32 1, %s4
  %s7 = scalar_select 0, %s6, %s4
  $region1: #{tpu_custom_call.1} parent=0
    #allocation2 [shape = 'u8[98304]{0}', space=vmem, size = 0x18000, scoped, tag = 'output window, operand 0, single buffered']
    #allocation3 [shape = 's32[1]{0}', space=sflag, size = 0x4, scoped, tag = 'scoped memory for tpu_custom_call.1']
    %8 = vsyncpa [#allocation3], 0
    // Predicated region
    $region2: #{tpu_custom_call.1} parent=1 // pred_check
      _
    $region3: #{tpu_custom_call.1} parent=1 // pred_check_branch
      %10 = sbr.rel (0) target = $region5
    $region4: #{tpu_custom_call.1} parent=1 // pred_region
      _
    $region5: #{tpu_custom_call.1} parent=1 // pred_fallthru
      _
    // Predicated region
    $region6: #{tpu_custom_call.1} parent=1 // pred_check
      _
    $region7: #{tpu_custom_call.1} parent=1 // pred_check_branch
      %12 = sbr.rel (0) target = $region9
    $region8: #{tpu_custom_call.1} parent=1 // pred_region
      _
    $region9: #{tpu_custom_call.1} parent=1 // pred_fallthru
      _
    // Predicated region
    $region10: #{tpu_custom_call.1} parent=1 // pred_check
      _
    $region11: #{tpu_custom_call.1} parent=1 // pred_check_branch
      %14 = sbr.rel (0) target = $region13
    $region12: #{tpu_custom_call.1} parent=1 // pred_region
      _
    $region13: #{tpu_custom_call.1} parent=1 // pred_fallthru
      _
    %v15 = vld [vmem:[%s0] sm:$0xff]
    %v16 = vld [vmem:[%s0 + $0x8] sm:$0xff]
    %v17 = vld [vmem:[%s0 + $0x10] sm:$0xff]
    %v18 = vld [vmem:[%s0 + $0x18] sm:$0xff]
    %v19 = vld [vmem:[%s0 + $0x20] sm:$0xff]
    %v20 = vld [vmem:[%s0 + $0x28] sm:$0xff]
    %v21 = vld [vmem:[%s0 + $0x30] sm:$0xff]
    %v22 = vld [vmem:[%s0 + $0x38] sm:$0xff]
    %v23 = vld [vmem:[%s0 + $0x40] sm:$0xff]
    %v24 = vld [vmem:[%s0 + $0x48] sm:$0xff]
    %v25 = vld [vmem:[%s0 + $0x50] sm:$0xff]
    %v26 = vld [vmem:[%s0 + $0x58] sm:$0xff]
    %v27 = vld [vmem:[%s2] sm:$0xff]
    %v28 = vld [vmem:[%s2 + $0x8] sm:$0xff]
    %v29 = vld [vmem:[%s2 + $0x10] sm:$0xff]
    %v30 = vld [vmem:[%s2 + $0x18] sm:$0xff]
    %v31 = vld [vmem:[%s2 + $0x20] sm:$0xff]
    %v32 = vld [vmem:[%s2 + $0x28] sm:$0xff]
    %v33 = vld [vmem:[%s2 + $0x30] sm:$0xff]
    %v34 = vld [vmem:[%s2 + $0x38] sm:$0xff]
    %v35 = vld [vmem:[%s2 + $0x40] sm:$0xff]
    %v36 = vld [vmem:[%s2 + $0x48] sm:$0xff]
    %v37 = vld [vmem:[%s2 + $0x50] sm:$0xff]
    %v38 = vld [vmem:[%s2 + $0x58] sm:$0xff]
    %v39 = vld [vmem:[%s2 + $0x60] sm:$0xff]
    %v40 = vld [vmem:[%s2 + $0x68] sm:$0xff]
    %v41 = vld [vmem:[%s2 + $0x70] sm:$0xff]
    %v42 = vld [vmem:[%s2 + $0x78] sm:$0xff]
    %v43 = vld [vmem:[%s1] sm:$0xff]
    %v44 = vld [vmem:[%s1 + $0x8] sm:$0xff]
    %v45 = vld [vmem:[%s1 + $0x10] sm:$0xff]
    %v46 = vld [vmem:[%s1 + $0x18] sm:$0xff]
    %v47 = vld [vmem:[%s1 + $0x20] sm:$0xff]
    %v48 = vld [vmem:[%s1 + $0x28] sm:$0xff]
    %v49 = vld [vmem:[%s1 + $0x30] sm:$0xff]
    %v50 = vld [vmem:[%s1 + $0x38] sm:$0xff]
    %v51 = vld [vmem:[%s1 + $0x40] sm:$0xff]
    %v52 = vld [vmem:[%s1 + $0x48] sm:$0xff]
    %v53 = vld [vmem:[%s1 + $0x50] sm:$0xff]
    %v54 = vld [vmem:[%s1 + $0x58] sm:$0xff]
    %56 = vset.pattern.permute.xlu0 0
    %57 = vperm.xlu0 %56, %v43
    %v58 = vpop.permute.xlu0 %57
    %61 = vset.pattern.permute.xlu0 0
    %62 = vperm.xlu0 %61, %v44
    %v63 = vpop.permute.xlu0 %62
    %66 = vset.pattern.permute.xlu0 0
    %67 = vperm.xlu0 %66, %v45
    %v68 = vpop.permute.xlu0 %67
    %71 = vset.pattern.permute.xlu0 0
    %72 = vperm.xlu0 %71, %v46
    %v73 = vpop.permute.xlu0 %72
    %76 = vset.pattern.permute.xlu0 0
    %77 = vperm.xlu0 %76, %v47
    %v78 = vpop.permute.xlu0 %77
    %81 = vset.pattern.permute.xlu0 0
    %82 = vperm.xlu0 %81, %v48
    %v83 = vpop.permute.xlu0 %82
    %86 = vset.pattern.permute.xlu0 0
    %87 = vperm.xlu0 %86, %v49
    %v88 = vpop.permute.xlu0 %87
    %91 = vset.pattern.permute.xlu0 0
    %92 = vperm.xlu0 %91, %v50
    %v93 = vpop.permute.xlu0 %92
    %96 = vset.pattern.permute.xlu0 0
    %97 = vperm.xlu0 %96, %v51
    %v98 = vpop.permute.xlu0 %97
    %101 = vset.pattern.permute.xlu0 0
    %102 = vperm.xlu0 %101, %v52
    %v103 = vpop.permute.xlu0 %102
    %106 = vset.pattern.permute.xlu0 0
    %107 = vperm.xlu0 %106, %v53
    %v108 = vpop.permute.xlu0 %107
    %111 = vset.pattern.permute.xlu0 0
    %112 = vperm.xlu0 %111, %v54
    %v113 = vpop.permute.xlu0 %112
    %vm115 = vcmask 523264
    %v117 = vsel %vm115, %v15, 0
    %v120 = vsel %vm115, %v16, 0
    %v123 = vsel %vm115, %v17, 0
    %v126 = vsel %vm115, %v18, 0
    %v129 = vsel %vm115, %v19, 0
    %v132 = vsel %vm115, %v20, 0
    %v135 = vsel %vm115, %v21, 0
    %v138 = vsel %vm115, %v22, 0
    %v141 = vsel %vm115, %v23, 0
    %v144 = vsel %vm115, %v24, 0
    %v147 = vsel %vm115, %v25, 0
    %v150 = vsel %vm115, %v26, 0
    %152 = vmatprep.subr.mxu0 %v28
    %153 = vmatpush1.msra.mxu0 %v27
    %154 = vmatprep.subr.mxu0 %v30
    %155 = vmatpush1.msra.mxu0 %v29
    %156 = vmatprep.subr.mxu0 %v32
    %157 = vmatpush1.msra.mxu0 %v31
    %158 = vmatprep.subr.mxu0 %v34
    %159 = vmatpush1.msra.mxu0 %v33
    %160 = vmatprep.subr.mxu0 %v36
    %161 = vmatpush1.msra.mxu0 %v35
    %162 = vmatprep.subr.mxu0 %v38
    %163 = vmatpush1.msra.mxu0 %v37
    %164 = vmatprep.subr.mxu0 %v40
    %165 = vmatpush1.msra.mxu0 %v39
    %166 = vmatprep.subr.mxu0 %v42
    %167 = vmatpush1.msra.mxu0 %v41
    %168 = vmatprep.subr.mxu0 0.0
    %169 = vmatpush1.msra.mxu0 0.0
    %170 = vmatprep.subr.mxu0 0.0
    %171 = vmatpush1.msra.mxu0 0.0
    %172 = vmatprep.subr.mxu0 0.0
    %173 = vmatpush1.msra.mxu0 0.0
    %174 = vmatprep.subr.mxu0 0.0
    %175 = vmatpush1.msra.mxu0 0.0
    %176 = vmatprep.subr.mxu0 0.0
    %177 = vmatpush1.msra.mxu0 0.0
    %178 = vmatprep.subr.mxu0 0.0
    %179 = vmatpush1.msra.mxu0 0.0
    %180 = vmatprep.subr.mxu0 0.0
    %181 = vmatpush1.msra.mxu0 0.0
    %182 = vmatprep.subr.mxu0 0.0
    %183 = vmatpush1.msra.mxu0 0.0
    %184 = vmatprep.subr.mxu0 0.0
    %185 = vmatpush1.msra.mxu0 0.0
    %186 = vmatprep.subr.mxu0 0.0
    %187 = vmatpush1.msra.mxu0 0.0
    %188 = vmatprep.subr.mxu0 0.0
    %189 = vmatpush1.msra.mxu0 0.0
    %190 = vmatprep.subr.mxu0 0.0
    %191 = vmatpush1.msra.mxu0 0.0
    %192 = vmatprep.subr.mxu0 0.0
    %193 = vmatpush1.msra.mxu0 0.0
    %194 = vmatprep.subr.mxu0 0.0
    %195 = vmatpush1.msra.mxu0 0.0
    %196 = vmatprep.subr.mxu0 0.0
    %197 = vmatpush1.msra.mxu0 0.0
    %198 = vmatprep.subr.mxu0 0.0
    %199 = vmatpush1.msra.mxu0 0.0
    %200 = vmatprep.subr.mxu0 0.0
    %201 = vmatpush1.msra.mxu0 0.0
    %202 = vmatprep.subr.mxu0 0.0
    %203 = vmatpush1.msra.mxu0 0.0
    %204 = vmatprep.subr.mxu0 0.0
    %205 = vmatpush1.msra.mxu0 0.0
    %206 = vmatprep.subr.mxu0 0.0
    %207 = vmatpush1.msra.mxu0 0.0
    %208 = vmatprep.subr.mxu0 0.0
    %209 = vmatpush1.msra.mxu0 0.0
    %210 = vmatprep.subr.mxu0 0.0
    %211 = vmatpush1.msra.mxu0 0.0
    %212 = vmatprep.subr.mxu0 0.0
    %213 = vmatpush1.msra.mxu0 0.0
    %214 = vmatprep.subr.mxu0 0.0
    %215 = vmatpush1.msra.mxu0 0.0
    %216 = vmatprep.mubr.f32.mxu0 0.0
    %217 = vmatmul.mubr.f32.gmra.mrb[0].mxu0 %v117
    %v218 = vpop.f32.mrb[0].mxu0
    %v219 = vadd.f32 %v58, %v218
    %v220 = vpop.f32.mrb[0].mxu0
    %v221 = vadd.f32 %v58, %v220
    %222 = vmatprep.mubr.f32.mxu0 0.0
    %223 = vmatmul.mubr.f32.gmra.mrb[0].mxu0 %v120
    %v224 = vpop.f32.mrb[0].mxu0
    %v225 = vadd.f32 %v63, %v224
    %v226 = vpop.f32.mrb[0].mxu0
    %v227 = vadd.f32 %v63, %v226
    %228 = vmatprep.mubr.f32.mxu0 0.0
    %229 = vmatmul.mubr.f32.gmra.mrb[0].mxu0 %v123
    %v230 = vpop.f32.mrb[0].mxu0
    %v231 = vadd.f32 %v68, %v230
    %v232 = vpop.f32.mrb[0].mxu0
    %v233 = vadd.f32 %v68, %v232
    %234 = vmatprep.mubr.f32.mxu0 0.0
    %235 = vmatmul.mubr.f32.gmra.mrb[0].mxu0 %v126
    %v236 = vpop.f32.mrb[0].mxu0
    %v237 = vadd.f32 %v73, %v236
    %v238 = vpop.f32.mrb[0].mxu0
    %v239 = vadd.f32 %v73, %v238
    %240 = vmatprep.mubr.f32.mxu0 0.0
    %241 = vmatmul.mubr.f32.gmra.mrb[0].mxu0 %v129
    %v242 = vpop.f32.mrb[0].mxu0
    %v243 = vadd.f32 %v78, %v242
    %v244 = vpop.f32.mrb[0].mxu0
    %v245 = vadd.f32 %v78, %v244
    %246 = vmatprep.mubr.f32.mxu0 0.0
    %247 = vmatmul.mubr.f32.gmra.mrb[0].mxu0 %v132
    %v248 = vpop.f32.mrb[0].mxu0
    %v249 = vadd.f32 %v83, %v248
    %v250 = vpop.f32.mrb[0].mxu0
    %v251 = vadd.f32 %v83, %v250
    %252 = vmatprep.mubr.f32.mxu0 0.0
    %253 = vmatmul.mubr.f32.gmra.mrb[0].mxu0 %v135
    %v254 = vpop.f32.mrb[0].mxu0
    %v255 = vadd.f32 %v88, %v254
    %v256 = vpop.f32.mrb[0].mxu0
    %v257 = vadd.f32 %v88, %v256
    %258 = vmatprep.mubr.f32.mxu0 0.0
    %259 = vmatmul.mubr.f32.gmra.mrb[0].mxu0 %v138
    %v260 = vpop.f32.mrb[0].mxu0
    %v261 = vadd.f32 %v93, %v260
    %v262 = vpop.f32.mrb[0].mxu0
    %v263 = vadd.f32 %v93, %v262
    %264 = vmatprep.mubr.f32.mxu0 0.0
    %265 = vmatmul.mubr.f32.gmra.mrb[0].mxu0 %v141
    %v266 = vpop.f32.mrb[0].mxu0
    %v267 = vadd.f32 %v98, %v266
    %v268 = vpop.f32.mrb[0].mxu0
    %v269 = vadd.f32 %v98, %v268
    %270 = vmatprep.mubr.f32.mxu0 0.0
    %271 = vmatmul.mubr.f32.gmra.mrb[0].mxu0 %v144
    %v272 = vpop.f32.mrb[0].mxu0
    %v273 = vadd.f32 %v103, %v272
    %v274 = vpop.f32.mrb[0].mxu0
    %v275 = vadd.f32 %v103, %v274
    %276 = vmatprep.mubr.f32.mxu0 0.0
    %277 = vmatmul.mubr.f32.gmra.mrb[0].mxu0 %v147
    %v278 = vpop.f32.mrb[0].mxu0
    %v279 = vadd.f32 %v108, %v278
    %v280 = vpop.f32.mrb[0].mxu0
    %v281 = vadd.f32 %v108, %v280
    %282 = vmatprep.mubr.f32.mxu0 0.0
    %283 = vmatmul.mubr.f32.gmra.mrb[0].mxu0 %v150
    %v284 = vpop.f32.mrb[0].mxu0
    %v285 = vadd.f32 %v113, %v284
    %v286 = vpop.f32.mrb[0].mxu0
    %v287 = vadd.f32 %v113, %v286
    %288 = vdwg.mxu0
    %v289 = vmul.f32 %v219, %v219
    %v290 = vmul.f32 %v221, %v221
    %v291 = vmul.f32 %v225, %v225
    %v292 = vmul.f32 %v227, %v227
    %v293 = vmul.f32 %v231, %v231
    %v294 = vmul.f32 %v233, %v233
    %v295 = vmul.f32 %v237, %v237
    %v296 = vmul.f32 %v239, %v239
    %v297 = vmul.f32 %v243, %v243
    %v298 = vmul.f32 %v245, %v245
    %v299 = vmul.f32 %v249, %v249
    %v300 = vmul.f32 %v251, %v251
    %v301 = vmul.f32 %v255, %v255
    %v302 = vmul.f32 %v257, %v257
    %v303 = vmul.f32 %v261, %v261
    %v304 = vmul.f32 %v263, %v263
    %v305 = vmul.f32 %v267, %v267
    %v306 = vmul.f32 %v269, %v269
    %v307 = vmul.f32 %v273, %v273
    %v308 = vmul.f32 %v275, %v275
    %v309 = vmul.f32 %v279, %v279
    %v310 = vmul.f32 %v281, %v281
    %v311 = vmul.f32 %v285, %v285
    %v312 = vmul.f32 %v287, %v287
    %v313 = vmul.f32 %v289, %v219
    %v314 = vmul.f32 %v290, %v221
    %v315 = vmul.f32 %v291, %v225
    %v316 = vmul.f32 %v292, %v227
    %v317 = vmul.f32 %v293, %v231
    %v318 = vmul.f32 %v294, %v233
    %v319 = vmul.f32 %v295, %v237
    %v320 = vmul.f32 %v296, %v239
    %v321 = vmul.f32 %v297, %v243
    %v322 = vmul.f32 %v298, %v245
    %v323 = vmul.f32 %v299, %v249
    %v324 = vmul.f32 %v300, %v251
    %v325 = vmul.f32 %v301, %v255
    %v326 = vmul.f32 %v302, %v257
    %v327 = vmul.f32 %v303, %v261
    %v328 = vmul.f32 %v304, %v263
    %v329 = vmul.f32 %v305, %v267
    %v330 = vmul.f32 %v306, %v269
    %v331 = vmul.f32 %v307, %v273
    %v332 = vmul.f32 %v308, %v275
    %v333 = vmul.f32 %v309, %v279
    %v334 = vmul.f32 %v310, %v281
    %v335 = vmul.f32 %v311, %v285
    %v336 = vmul.f32 %v312, %v287
    %v337 = vmul.f32 %v313, 0.044715
    %v338 = vmul.f32 %v314, 0.044715
    %v339 = vmul.f32 %v315, 0.044715
    %v340 = vmul.f32 %v316, 0.044715
    %v341 = vmul.f32 %v317, 0.044715
    %v342 = vmul.f32 %v318, 0.044715
    %v343 = vmul.f32 %v319, 0.044715
    %v344 = vmul.f32 %v320, 0.044715
    %v345 = vmul.f32 %v321, 0.044715
    %v346 = vmul.f32 %v322, 0.044715
    %v347 = vmul.f32 %v323, 0.044715
    %v348 = vmul.f32 %v324, 0.044715
    %v349 = vmul.f32 %v325, 0.044715
    %v350 = vmul.f32 %v326, 0.044715
    %v351 = vmul.f32 %v327, 0.044715
    %v352 = vmul.f32 %v328, 0.044715
    %v353 = vmul.f32 %v329, 0.044715
    %v354 = vmul.f32 %v330, 0.044715
    %v355 = vmul.f32 %v331, 0.044715
    %v356 = vmul.f32 %v332, 0.044715
    %v357 = vmul.f32 %v333, 0.044715
    %v358 = vmul.f32 %v334, 0.044715
    %v359 = vmul.f32 %v335, 0.044715
    %v360 = vmul.f32 %v336, 0.044715
    %v361 = vadd.f32 %v219, %v337
    %v362 = vadd.f32 %v221, %v338
    %v363 = vadd.f32 %v225, %v339
    %v364 = vadd.f32 %v227, %v340
    %v365 = vadd.f32 %v231, %v341
    %v366 = vadd.f32 %v233, %v342
    %v367 = vadd.f32 %v237, %v343
    %v368 = vadd.f32 %v239, %v344
    %v369 = vadd.f32 %v243, %v345
    %v370 = vadd.f32 %v245, %v346
    %v371 = vadd.f32 %v249, %v347
    %v372 = vadd.f32 %v251, %v348
    %v373 = vadd.f32 %v255, %v349
    %v374 = vadd.f32 %v257, %v350
    %v375 = vadd.f32 %v261, %v351
    %v376 = vadd.f32 %v263, %v352
    %v377 = vadd.f32 %v267, %v353
    %v378 = vadd.f32 %v269, %v354
    %v379 = vadd.f32 %v273, %v355
    %v380 = vadd.f32 %v275, %v356
    %v381 = vadd.f32 %v279, %v357
    %v382 = vadd.f32 %v281, %v358
    %v383 = vadd.f32 %v285, %v359
    %v384 = vadd.f32 %v287, %v360
    %v385 = vmul.f32 %v361, 0.7978846
    %v386 = vmul.f32 %v362, 0.7978846
    %v387 = vmul.f32 %v363, 0.7978846
    %v388 = vmul.f32 %v364, 0.7978846
    %v389 = vmul.f32 %v365, 0.7978846
    %v390 = vmul.f32 %v366, 0.7978846
    %v391 = vmul.f32 %v367, 0.7978846
    %v392 = vmul.f32 %v368, 0.7978846
    %v393 = vmul.f32 %v369, 0.7978846
    %v394 = vmul.f32 %v370, 0.7978846
    %v395 = vmul.f32 %v371, 0.7978846
    %v396 = vmul.f32 %v372, 0.7978846
    %v397 = vmul.f32 %v373, 0.7978846
    %v398 = vmul.f32 %v374, 0.7978846
    %v399 = vmul.f32 %v375, 0.7978846
    %v400 = vmul.f32 %v376, 0.7978846
    %v401 = vmul.f32 %v377, 0.7978846
    %v402 = vmul.f32 %v378, 0.7978846
    %v403 = vmul.f32 %v379, 0.7978846
    %v404 = vmul.f32 %v380, 0.7978846
    %v405 = vmul.f32 %v381, 0.7978846
    %v406 = vmul.f32 %v382, 0.7978846
    %v407 = vmul.f32 %v383, 0.7978846
    %v408 = vmul.f32 %v384, 0.7978846
    %v409 = vtanh.pop %v385
    %v410 = vtanh.pop %v386
    %v411 = vtanh.pop %v387
    %v412 = vtanh.pop %v388
    %v413 = vtanh.pop %v389
    %v414 = vtanh.pop %v390
    %v415 = vtanh.pop %v391
    %v416 = vtanh.pop %v392
    %v417 = vtanh.pop %v393
    %v418 = vtanh.pop %v394
    %v419 = vtanh.pop %v395
    %v420 = vtanh.pop %v396
    %v421 = vtanh.pop %v397
    %v422 = vtanh.pop %v398
    %v423 = vtanh.pop %v399
    %v424 = vtanh.pop %v400
    %v425 = vtanh.pop %v401
    %v426 = vtanh.pop %v402
    %v427 = vtanh.pop %v403
    %v428 = vtanh.pop %v404
    %v429 = vtanh.pop %v405
    %v430 = vtanh.pop %v406
    %v431 = vtanh.pop %v407
    %v432 = vtanh.pop %v408
    %v433 = vadd.f32 %v409, 1.0
    %v434 = vadd.f32 %v410, 1.0
    %v435 = vadd.f32 %v411, 1.0
    %v436 = vadd.f32 %v412, 1.0
    %v437 = vadd.f32 %v413, 1.0
    %v438 = vadd.f32 %v414, 1.0
    %v439 = vadd.f32 %v415, 1.0
    %v440 = vadd.f32 %v416, 1.0
    %v441 = vadd.f32 %v417, 1.0
    %v442 = vadd.f32 %v418, 1.0
    %v443 = vadd.f32 %v419, 1.0
    %v444 = vadd.f32 %v420, 1.0
    %v445 = vadd.f32 %v421, 1.0
    %v446 = vadd.f32 %v422, 1.0
    %v447 = vadd.f32 %v423, 1.0
    %v448 = vadd.f32 %v424, 1.0
    %v449 = vadd.f32 %v425, 1.0
    %v450 = vadd.f32 %v426, 1.0
    %v451 = vadd.f32 %v427, 1.0
    %v452 = vadd.f32 %v428, 1.0
    %v453 = vadd.f32 %v429, 1.0
    %v454 = vadd.f32 %v430, 1.0
    %v455 = vadd.f32 %v431, 1.0
    %v456 = vadd.f32 %v432, 1.0
    %v457 = vmul.f32 %v219, %v433
    %v458 = vmul.f32 %v221, %v434
    %v459 = vmul.f32 %v225, %v435
    %v460 = vmul.f32 %v227, %v436
    %v461 = vmul.f32 %v231, %v437
    %v462 = vmul.f32 %v233, %v438
    %v463 = vmul.f32 %v237, %v439
    %v464 = vmul.f32 %v239, %v440
    %v465 = vmul.f32 %v243, %v441
    %v466 = vmul.f32 %v245, %v442
    %v467 = vmul.f32 %v249, %v443
    %v468 = vmul.f32 %v251, %v444
    %v469 = vmul.f32 %v255, %v445
    %v470 = vmul.f32 %v257, %v446
    %v471 = vmul.f32 %v261, %v447
    %v472 = vmul.f32 %v263, %v448
    %v473 = vmul.f32 %v267, %v449
    %v474 = vmul.f32 %v269, %v450
    %v475 = vmul.f32 %v273, %v451
    %v476 = vmul.f32 %v275, %v452
    %v477 = vmul.f32 %v279, %v453
    %v478 = vmul.f32 %v281, %v454
    %v479 = vmul.f32 %v285, %v455
    %v480 = vmul.f32 %v287, %v456
    %481 = vst [vmem:[#allocation2] sm:$0xff] %v457
    %482 = vst [vmem:[#allocation2 + $0x8] sm:$0xff] %v458
    %483 = vst [vmem:[#allocation2 + $0x10] sm:$0xff] %v459
    %484 = vst [vmem:[#allocation2 + $0x18] sm:$0xff] %v460
    %485 = vst [vmem:[#allocation2 + $0x20] sm:$0xff] %v461
    %486 = vst [vmem:[#allocation2 + $0x28] sm:$0xff] %v462
    %487 = vst [vmem:[#allocation2 + $0x30] sm:$0xff] %v463
    %488 = vst [vmem:[#allocation2 + $0x38] sm:$0xff] %v464
    %489 = vst [vmem:[#allocation2 + $0x40] sm:$0xff] %v465
    %490 = vst [vmem:[#allocation2 + $0x48] sm:$0xff] %v466
    %491 = vst [vmem:[#allocation2 + $0x50] sm:$0xff] %v467
    %492 = vst [vmem:[#allocation2 + $0x58] sm:$0xff] %v468
    %493 = vst [vmem:[#allocation2 + $0x60] sm:$0xff] %v469
    %494 = vst [vmem:[#allocation2 + $0x68] sm:$0xff] %v470
    %495 = vst [vmem:[#allocation2 + $0x70] sm:$0xff] %v471
    %496 = vst [vmem:[#allocation2 + $0x78] sm:$0xff] %v472
    %497 = vst [vmem:[#allocation2 + $0x80] sm:$0xff] %v473
    %498 = vst [vmem:[#allocation2 + $0x88] sm:$0xff] %v474
    %499 = vst [vmem:[#allocation2 + $0x90] sm:$0xff] %v475
    %500 = vst [vmem:[#allocation2 + $0x98] sm:$0xff] %v476
    %501 = vst [vmem:[#allocation2 + $0xa0] sm:$0xff] %v477
    %502 = vst [vmem:[#allocation2 + $0xa8] sm:$0xff] %v478
    %503 = vst [vmem:[#allocation2 + $0xb0] sm:$0xff] %v479
    %504 = vst [vmem:[#allocation2 + $0xb8] sm:$0xff] %v480
    // Predicated region
    $region14: #{tpu_custom_call.1} parent=1 // pred_check
      _
    $region15: #{tpu_custom_call.1} parent=1 // pred_check_branch
      %506 = sbr.rel (0) target = $region17
    $region16: #{tpu_custom_call.1} parent=1 // pred_region
      %s508 = ssub.s32 3072, 3072
      %509 = vsyncadd [#allocation3], %s508
      %s510 = sshll.u32 [#allocation2], 4
      %s511 = int_to_ptr.vmem [resolvable:$true] %s510
      %516 = dma.vmem_to_hbm [thread:$0]  %s511, 3072, %s3, [#allocation3], 256, 256, 16
    $region17: #{tpu_custom_call.1} parent=1 // pred_fallthru
      _
    // Predicated region
    $region18: #{tpu_custom_call.1} parent=1 // pred_check
      _
    $region19: #{tpu_custom_call.1} parent=1 // pred_check_branch
      %518 = sbr.rel (0) target = $region21
    $region20: #{tpu_custom_call.1} parent=1 // pred_region
      %519 = dma.done [#allocation3], 3072
    $region21: #{tpu_custom_call.1} parent=1 // pred_fallthru
      _
    %520 = vsyncpa [#allocation3], 1

</llo_original>
